<compile_context>
chip_gen: v5e
topology: v5e:2x2
jax: 0.10.0
libtpu: 0.0.40
codegen_flags: <defaults>
</compile_context>

<pallas_src>
import functools

import jax
import jax.numpy as jnp
from jax.experimental import pallas as pl
from jax.experimental.pallas import tpu as pltpu


def _dense_residual_ln_kernel(x_ref, res_ref, w_ref, b_ref, g_ref, beta_ref, o_ref,
                              *, eps, inv_h, mxu_dtype):
    x = x_ref[...]
    w = w_ref[...]
    if mxu_dtype is not None and x.dtype != mxu_dtype:
        # Feed the MXU a narrower dtype (v5e is MXU-bound for this op); the
        # accumulation below stays f32.
        x = x.astype(mxu_dtype)
        w = w.astype(mxu_dtype)
    precision = jax.lax.Precision.HIGHEST if x.dtype == jnp.float32 else None

    # Dense: x @ W + b  (MXU matmul, f32 accumulation).
    h = jnp.dot(x, w, precision=precision, preferred_element_type=jnp.float32)
    h = h + b_ref[...].astype(jnp.float32)
    # TODO(synk): training-mode dropout (pltpu.prng_random_bits mask) intentionally
    # omitted; dropout is identity at inference.
    h = h + res_ref[...].astype(jnp.float32)            # residual add

    # LayerNorm over the hidden (lane) axis; both moments in a single pass over h
    # (saves one full [tm, H] pass vs. the centered two-pass form).
    mean = jnp.sum(h, axis=-1, keepdims=True) * inv_h
    msq = jnp.sum(h * h, axis=-1, keepdims=True) * inv_h
    var = jnp.maximum(msq - mean * mean, 0.0)
    rstd = jax.lax.rsqrt(var + eps)
    out = (h - mean) * rstd * g_ref[...].astype(jnp.float32) \
          + beta_ref[...].astype(jnp.float32)
    o_ref[...] = out.astype(o_ref.dtype)


def _sublane_align(itemsize):
    # Sub-32-bit dtypes pack rows along sublanes: 2 rows/sublane for 16-bit,
    # 4 rows/sublane for 8-bit — keep the token tile a multiple of the packing.
    return {4: 8, 2: 16, 1: 32}.get(int(itemsize), 8)


def _vmem_capacity_bytes():
    try:
        return int(pltpu.get_tpu_info().vmem_capacity_bytes)
    except Exception:
        return 64 * 2 ** 20            # conservative fallback (v7x per-TC VMEM)


def _footprint_bytes(tm, K, H, act_bytes, w_bytes):
    resident = K * H * w_bytes + 3 * H * 4                       # W + bias/gamma/beta
    stream = (2 * tm * K * act_bytes                             # x (double-buffered)
              + 2 * tm * H * act_bytes                           # residual
              + 2 * tm * H * act_bytes)                          # output
    scratch = 3 * tm * max(K, H) * 4                             # ~3 live f32 copies
    return resident + stream + scratch


def _choose_tm(T, K, H, act_bytes, w_bytes, align, vmem_cap):
    """Largest aligned token tile (<=1024) whose streams + residents + f32 scratch
    fit a generation-aware VMEM budget."""
    budget = int(0.68 * vmem_cap)
    tm = 1024
    while tm > align and _footprint_bytes(tm, K, H, act_bytes, w_bytes) > budget:
        tm //= 2
    # Don't tile past the token count; keep it a divisor-friendly, aligned value.
    tm = min(tm, max(align, pl.next_power_of_2(max(T, 1))))
    return max(align, (tm // align) * align)


def _vmem_limit_bytes(tm, K, H, act_bytes, w_bytes, vmem_cap):
    cap = int(0.75 * vmem_cap)         # ~48 MiB on 64 MiB parts, ~96 MiB on 128 MiB
    est = int(_footprint_bytes(tm, K, H, act_bytes, w_bytes) * 1.25)
    return int(min(max(est, min(32 * 2 ** 20, cap)), cap))


def convert_linear_weight(weight):
    """One-time (parameter-load-time) conversion of a PyTorch-layout (out, in)
    Linear weight to the (in, out) layout the kernel consumes, so no per-call HBM
    transpose is paid under jit."""
    return jnp.asarray(weight).T


def fused_dense_residual_layernorm(hidden_states, input_tensor, weight_t, bias, gamma,
                                   beta, eps=1e-12, *, tm=None, mxu_input_dtype=None):
    """Fused Linear -> dropout(identity) -> residual add -> LayerNorm.

    hidden_states: [..., K]   dense input
    input_tensor : [..., H]   residual
    weight_t     : [K, H]     weight already transposed via convert_linear_weight
    bias/gamma/beta: [H]

    Activations stream at their own dtype (pass bf16 slabs in the memory-bound
    regime); the matmul accumulates in f32 and LayerNorm math stays in f32.
    Set mxu_input_dtype=jnp.bfloat16 on v5e to feed the MXU bf16 from f32 streams.
    """
    lead = hidden_states.shape[:-1]
    K = hidden_states.shape[-1]
    H = input_tensor.shape[-1]
    assert weight_t.shape == (K, H), (weight_t.shape, K, H)
    assert input_tensor.shape[:-1] == lead

    T = 1
    for d in lead:
        T *= int(d)

    act_dtype = hidden_states.dtype
    act_bytes = jnp.dtype(act_dtype).itemsize
    w_bytes = jnp.dtype(weight_t.dtype).itemsize

    x2d = hidden_states.reshape(T, K)
    r2d = input_tensor.reshape(T, H)
    b2d = bias.reshape(1, H).astype(jnp.float32)
    g2d = gamma.reshape(1, H).astype(jnp.float32)
    beta2d = beta.reshape(1, H).astype(jnp.float32)

    vmem_cap = _vmem_capacity_bytes()
    align = _sublane_align(act_bytes)
    if tm is None:
        tm = _choose_tm(T, K, H, act_bytes, w_bytes, align, vmem_cap)

    # Partial last block instead of jnp.pad: rows are independent (LayerNorm is
    # strictly per-row), so undefined tail rows never contaminate valid rows and
    # the out-of-bounds part of the last output block is masked by Pallas.
    grid = (pl.cdiv(T, tm),)

    kernel = functools.partial(_dense_residual_ln_kernel, eps=float(eps),
                               inv_h=float(1.0 / H), mxu_dtype=mxu_input_dtype)

    out2d = pl.pallas_call(
        kernel,
        out_shape=jax.ShapeDtypeStruct((T, H), act_dtype),
        grid_spec=pltpu.PrefetchScalarGridSpec(
            num_scalar_prefetch=0,
            grid=grid,
            in_specs=[
                # streamed (double-buffered) token tiles
                pl.BlockSpec((tm, K), lambda i: (i, 0)),            # x
                pl.BlockSpec((tm, H), lambda i: (i, 0)),            # residual
                # constant operands: whole-array single-buffered VMEM residents
                # TODO(synk): on v7x consider VMEM_SHARED/CMEM so both TCs share
                # one copy of the weight instead of private residents.
                pl.BlockSpec(memory_space=pltpu.MemorySpace.VMEM),  # weight (K, H)
                pl.BlockSpec(memory_space=pltpu.MemorySpace.VMEM),  # bias
                pl.BlockSpec(memory_space=pltpu.MemorySpace.VMEM),  # LN gamma
                pl.BlockSpec(memory_space=pltpu.MemorySpace.VMEM),  # LN beta
            ],
            out_specs=pl.BlockSpec((tm, H), lambda i: (i, 0)),
        ),
        compiler_params=pltpu.CompilerParams(
            # Token tiles are independent; on v7x this lets the grid shard across
            # the 2 TensorCores.  TODO(synk): if a trace shows a single TC doing
            # all tiles, switch this axis to pltpu.CORE_PARALLEL.
            dimension_semantics=("parallel",),
            vmem_limit_bytes=_vmem_limit_bytes(tm, K, H, act_bytes, w_bytes, vmem_cap),
        ),
    )(x2d, r2d, weight_t, b2d, g2d, beta2d)

    return out2d.reshape(*lead, H)


def bert_self_output(hidden_states, input_tensor, weight_t, bias, gamma, beta,
                     eps=1e-12, **kw):
    """BertSelfOutput / BertOutput forward (eval mode)."""
    return fused_dense_residual_layernorm(hidden_states, input_tensor, weight_t, bias,
                                          gamma, beta, eps, **kw)


def reference(hidden_states, input_tensor, weight, bias, gamma, beta, eps=1e-12):
    h = jnp.dot(hidden_states.astype(jnp.float32), weight.T.astype(jnp.float32),
                precision=jax.lax.Precision.HIGHEST) + bias
    h = h + input_tensor.astype(jnp.float32)
    mean = jnp.mean(h, axis=-1, keepdims=True)
    var = jnp.mean((h - mean) ** 2, axis=-1, keepdims=True)
    return (h - mean) / jnp.sqrt(var + eps) * gamma + beta


if __name__ == "__main__":
    eps = 1e-12
    key = jax.random.PRNGKey(0)
    k1, k2, k3, k4 = jax.random.split(key, 4)

    B, S, H = 2, 8, 32
    hidden_states = jax.random.normal(k1, (B, S, H), dtype=jnp.float32)
    input_tensor = jax.random.normal(k2, (B, S, H), dtype=jnp.float32)
    # Deterministic parameter init (Linear: PyTorch (out, in) weight + bias; LN).
    weight = jax.random.normal(k3, (H, H), dtype=jnp.float32) * 0.02
    bias = jax.random.normal(k4, (H,), dtype=jnp.float32) * 0.02
    gamma = jnp.ones((H,), dtype=jnp.float32)
    beta = jnp.zeros((H,), dtype=jnp.float32)

    # One-time layout conversion (parameter-load time), not per call.
    weight_t = convert_linear_weight(weight)

    ref = reference(hidden_states, input_tensor, weight, bias, gamma, beta, eps)

    # 1) f32 path (bit-accurate MXU, tight tolerance).
    out = bert_self_output(hidden_states, input_tensor, weight_t, bias, gamma, beta, eps)
    out = jax.block_until_ready(out)
    assert out.shape == (B, S, H)
    assert jnp.allclose(out, ref, atol=1e-5, rtol=1e-5), \
        f"f32 max err {jnp.max(jnp.abs(out - ref))}"

    # 2) token count not divisible by the tile (exercises the partial last block;
    #    no jnp.pad / output-slice copies in the wrapper).
    S2 = 9
    hs2 = jax.random.normal(k1, (B, S2, H), dtype=jnp.float32)
    it2 = jax.random.normal(k2, (B, S2, H), dtype=jnp.float32)
    ref2 = reference(hs2, it2, weight, bias, gamma, beta, eps)
    out2 = bert_self_output(hs2, it2, weight_t, bias, gamma, beta, eps, tm=16)
    out2 = jax.block_until_ready(out2)
    assert out2.shape == (B, S2, H)
    assert jnp.allclose(out2, ref2, atol=1e-5, rtol=1e-5), \
        f"partial-block max err {jnp.max(jnp.abs(out2 - ref2))}"

    # 3) bf16 streaming path (memory-bound regime): activations + weight in bf16,
    #    f32 MXU accumulation and f32 LayerNorm inside the kernel.
    out_bf16 = bert_self_output(
        hidden_states.astype(jnp.bfloat16), input_tensor.astype(jnp.bfloat16),
        weight_t.astype(jnp.bfloat16), bias, gamma, beta, eps)
    out_bf16 = jax.block_until_ready(out_bf16)
    err_bf16 = jnp.max(jnp.abs(out_bf16.astype(jnp.float32) - ref))
    assert err_bf16 < 1e-1, f"bf16 max err {err_bf16}"

    # 4) v5e-style path: f32 streams, MXU explicitly fed bf16 (f32 accumulation).
    out_mxu = bert_self_output(hidden_states, input_tensor, weight_t, bias, gamma,
                               beta, eps, mxu_input_dtype=jnp.bfloat16)
    out_mxu = jax.block_until_ready(out_mxu)
    err_mxu = jnp.max(jnp.abs(out_mxu - ref))
    assert err_mxu < 1e-1, f"bf16-MXU max err {err_mxu}"

    print("KERNEL_OK")
</pallas_src>

<mosaic_0001>
module attributes {stable_mosaic.version = 11 : i64} {
  func.func @_dense_residual_ln_kernel(%arg0: i32, %arg1: memref<16x32xf32, #tpu.memory_space<vmem>>, %arg2: memref<16x32xf32, #tpu.memory_space<vmem>>, %arg3: memref<32x32xf32, #tpu.memory_space<vmem>>, %arg4: memref<1x32xf32, #tpu.memory_space<vmem>>, %arg5: memref<1x32xf32, #tpu.memory_space<vmem>>, %arg6: memref<1x32xf32, #tpu.memory_space<vmem>>, %arg7: memref<16x32xf32, #tpu.memory_space<vmem>>) attributes {dimension_semantics = [#tpu.dimension_semantics<parallel>], iteration_bounds = array<i64: 1>, scalar_prefetch = 0 : i64, scratch_operands = 0 : i64, tpu.core_type = #tpu.core_type<tc>, window_params = [{transform_indices = @transform_0, window_bounds = array<i64: 16, 32>}, {transform_indices = @transform_1, window_bounds = array<i64: 16, 32>}, {pipeline_mode = #tpu.pipeline_mode<synchronous>, transform_indices = @transform_2, window_bounds = array<i64: 32, 32>}, {pipeline_mode = #tpu.pipeline_mode<synchronous>, transform_indices = @transform_3, window_bounds = array<i64: 1, 32>}, {pipeline_mode = #tpu.pipeline_mode<synchronous>, transform_indices = @transform_4, window_bounds = array<i64: 1, 32>}, {pipeline_mode = #tpu.pipeline_mode<synchronous>, transform_indices = @transform_5, window_bounds = array<i64: 1, 32>}, {transform_indices = @transform_6, window_bounds = array<i64: 16, 32>}]} {
    %c0 = arith.constant 0 : index
    %c0_0 = arith.constant 0 : index
    %0 = vector.load %arg1[%c0, %c0_0] : memref<16x32xf32, #tpu.memory_space<vmem>>, vector<16x32xf32>
    %c0_1 = arith.constant 0 : index
    %c0_2 = arith.constant 0 : index
    %1 = vector.load %arg3[%c0_1, %c0_2] : memref<32x32xf32, #tpu.memory_space<vmem>>, vector<32x32xf32>
    %cst = arith.constant dense<0.000000e+00> : vector<16x32xf32>
    %2 = tpu.matmul %0, %1, %cst {dimension_numbers = #tpu.dot_dimension_numbers<[1], [0], [0], [1], [0, 0, 1, 1], [], []>, precision = #tpu.contract_precision<fp32>} : vector<16x32xf32>, vector<32x32xf32>, vector<16x32xf32> -> vector<16x32xf32>
    %c0_3 = arith.constant 0 : index
    %c0_4 = arith.constant 0 : index
    %3 = vector.load %arg4[%c0_3, %c0_4] : memref<1x32xf32, #tpu.memory_space<vmem>>, vector<1x32xf32>
    %4 = vector.broadcast %3 : vector<1x32xf32> to vector<16x32xf32>
    %5 = arith.addf %2, %4 : vector<16x32xf32>
    %c0_5 = arith.constant 0 : index
    %c0_6 = arith.constant 0 : index
    %6 = vector.load %arg2[%c0_5, %c0_6] : memref<16x32xf32, #tpu.memory_space<vmem>>, vector<16x32xf32>
    %7 = arith.addf %5, %6 : vector<16x32xf32>
    %cst_7 = arith.constant dense<0.000000e+00> : vector<16xf32>
    %8 = vector.multi_reduction <add>, %7, %cst_7 [1] : vector<16x32xf32> to vector<16xf32>
    %9 = vector.shape_cast %8 : vector<16xf32> to vector<16x1xf32>
    %cst_8 = arith.constant 3.125000e-02 : f32
    %10 = vector.broadcast %cst_8 : f32 to vector<16x1xf32>
    %11 = arith.mulf %9, %10 : vector<16x1xf32>
    %12 = arith.mulf %7, %7 : vector<16x32xf32>
    %cst_9 = arith.constant dense<0.000000e+00> : vector<16xf32>
    %13 = vector.multi_reduction <add>, %12, %cst_9 [1] : vector<16x32xf32> to vector<16xf32>
    %14 = vector.shape_cast %13 : vector<16xf32> to vector<16x1xf32>
    %cst_10 = arith.constant 3.125000e-02 : f32
    %15 = vector.broadcast %cst_10 : f32 to vector<16x1xf32>
    %16 = arith.mulf %14, %15 : vector<16x1xf32>
    %17 = arith.mulf %11, %11 : vector<16x1xf32>
    %18 = arith.subf %16, %17 : vector<16x1xf32>
    %cst_11 = arith.constant 0.000000e+00 : f32
    %19 = vector.broadcast %cst_11 : f32 to vector<16x1xf32>
    %20 = arith.maximumf %18, %19 : vector<16x1xf32>
    %cst_12 = arith.constant 9.99999996E-13 : f32
    %21 = vector.broadcast %cst_12 : f32 to vector<16x1xf32>
    %22 = arith.addf %20, %21 : vector<16x1xf32>
    %23 = math.rsqrt %22 : vector<16x1xf32>
    %24 = vector.broadcast %11 : vector<16x1xf32> to vector<16x32xf32>
    %25 = arith.subf %7, %24 : vector<16x32xf32>
    %26 = vector.broadcast %23 : vector<16x1xf32> to vector<16x32xf32>
    %27 = arith.mulf %25, %26 : vector<16x32xf32>
    %c0_13 = arith.constant 0 : index
    %c0_14 = arith.constant 0 : index
    %28 = vector.load %arg5[%c0_13, %c0_14] : memref<1x32xf32, #tpu.memory_space<vmem>>, vector<1x32xf32>
    %29 = vector.broadcast %28 : vector<1x32xf32> to vector<16x32xf32>
    %30 = arith.mulf %27, %29 : vector<16x32xf32>
    %c0_15 = arith.constant 0 : index
    %c0_16 = arith.constant 0 : index
    %31 = vector.load %arg6[%c0_15, %c0_16] : memref<1x32xf32, #tpu.memory_space<vmem>>, vector<1x32xf32>
    %32 = vector.broadcast %31 : vector<1x32xf32> to vector<16x32xf32>
    %33 = arith.addf %30, %32 : vector<16x32xf32>
    %c0_17 = arith.constant 0 : index
    %c0_18 = arith.constant 0 : index
    %34 = vector.load %arg7[%c0_17, %c0_18] : memref<16x32xf32, #tpu.memory_space<vmem>>, vector<16x32xf32>
    tpu.vector_store %arg7[%c0_17, %c0_18], %33 {strides = array<i32>} : memref<16x32xf32, #tpu.memory_space<vmem>>, vector<16x32xf32>,
    return
  }
  func.func @transform_0(%arg0: i32) -> (i32, i32) {
    %c0_i32 = arith.constant 0 : i32
    %c0_i32_0 = arith.constant 0 : i32
    return %arg0, %c0_i32 : i32, i32
  }
  func.func @transform_1(%arg0: i32) -> (i32, i32) {
    %c0_i32 = arith.constant 0 : i32
    %c0_i32_0 = arith.constant 0 : i32
    return %arg0, %c0_i32 : i32, i32
  }
  func.func @transform_2(%arg0: i32) -> (i32, i32) {
    %c0_i32 = arith.constant 0 : i32
    %c0_i32_0 = arith.constant 0 : i32
    %c0_i32_1 = arith.constant 0 : i32
    return %c0_i32, %c0_i32_0 : i32, i32
  }
  func.func @transform_3(%arg0: i32) -> (i32, i32) {
    %c0_i32 = arith.constant 0 : i32
    %c0_i32_0 = arith.constant 0 : i32
    %c0_i32_1 = arith.constant 0 : i32
    return %c0_i32, %c0_i32_0 : i32, i32
  }
  func.func @transform_4(%arg0: i32) -> (i32, i32) {
    %c0_i32 = arith.constant 0 : i32
    %c0_i32_0 = arith.constant 0 : i32
    %c0_i32_1 = arith.constant 0 : i32
    return %c0_i32, %c0_i32_0 : i32, i32
  }
  func.func @transform_5(%arg0: i32) -> (i32, i32) {
    %c0_i32 = arith.constant 0 : i32
    %c0_i32_0 = arith.constant 0 : i32
    %c0_i32_1 = arith.constant 0 : i32
    return %c0_i32, %c0_i32_0 : i32, i32
  }
  func.func @transform_6(%arg0: i32) -> (i32, i32) {
    %c0_i32 = arith.constant 0 : i32
    %c0_i32_0 = arith.constant 0 : i32
    return %arg0, %c0_i32 : i32, i32
  }
}

</mosaic_0001>

<llo_original>
// kernel: tpu_custom_call.1
$region0: #{tpu_custom_call.1}
  #allocation0 [shape = 'u32[]', space=smem, size = 0x4, offset = 0x4, fixed_abs, tag = 'smem constant byte address 0x4 - core index']
  #allocation1 [shape = 'u32[72,128]{1,0:T(1,128)}', space=vmem, size = 0x9000, scoped, tag = 'internal scratch']
  %s0 = inlined_call_operand.hbm [shape: f32[16,32], index: 0, kind: input, shape index: {}]
  %s1 = inlined_call_operand.hbm [shape: f32[16,32], index: 1, kind: input, shape index: {}]
  %s2 = inlined_call_operand.hbm [shape: f32[32,32], index: 2, kind: input, shape index: {}]
  %s3 = inlined_call_operand.vmem [shape: f32[1,32], index: 3, kind: input, shape index: {}]
  %s4 = inlined_call_operand.vmem [shape: f32[1,32], index: 4, kind: input, shape index: {}]
  %s5 = inlined_call_operand.vmem [shape: f32[1,32], index: 5, kind: input, shape index: {}]
  %s6 = inlined_call_operand.hbm [shape: f32[16,32], index: 6, kind: output, shape index: {}]
  %s7 = sld [smem:[#allocation0]]
  $region46: #{tpu_custom_call.1} parent=0
    _
  %s9 = ssub.s32 1, %s7
  %s10 = scalar_select 0, %s9, %s7
  $region1: #{tpu_custom_call.1} parent=0
    #allocation2 [shape = 'u8[8192]{0}', space=vmem, size = 0x2000, scoped, tag = 'input window, operand 0, single buffered']
    #allocation3 [shape = 's32[1]{0}', space=sflag, size = 0x4, scoped, tag = 'scoped memory for tpu_custom_call.1']
    #allocation4 [shape = 's32[1]{0}', space=sflag, size = 0x4, scoped, tag = 'scoped memory for tpu_custom_call.1']
    #allocation5 [shape = 'u8[8192]{0}', space=vmem, size = 0x2000, scoped, tag = 'input window, operand 1, single buffered']
    #allocation6 [shape = 's32[1]{0}', space=sflag, size = 0x4, scoped, tag = 'scoped memory for tpu_custom_call.1']
    #allocation7 [shape = 'u8[16384]{0}', space=vmem, size = 0x4000, scoped, tag = 'input window, operand 2, single buffered']
    #allocation8 [shape = 'u8[8192]{0}', space=vmem, size = 0x2000, scoped, tag = 'output window, operand 0, single buffered']
    %11 = vsyncpa [#allocation3], 0
    %12 = vsyncpa [#allocation6], 0
    %13 = vsyncpa [#allocation4], 0
    // Predicated region
    $region2: #{tpu_custom_call.1} parent=1 // pred_check
      _
    $region3: #{tpu_custom_call.1} parent=1 // pred_check_branch
      %15 = sbr.rel (0) target = $region5
    $region4: #{tpu_custom_call.1} parent=1 // pred_region
      %17 = vsyncadd [#allocation3], 0
      %s18 = sshll.u32 %s0, 4
      %s19 = int_to_ptr.hbm [resolvable:$true] %s18
      %s20 = sshll.u32 [#allocation2], 4
      %s21 = int_to_ptr.vmem [resolvable:$true] %s20
      %26 = dma.hbm_to_vmem [thread:$0]  %s19, 256, %s21, [#allocation3], 128, 128, 8
    $region5: #{tpu_custom_call.1} parent=1 // pred_fallthru
      _
    // Predicated region
    $region6: #{tpu_custom_call.1} parent=1 // pred_check
      _
    $region7: #{tpu_custom_call.1} parent=1 // pred_check_branch
      %28 = sbr.rel (0) target = $region9
    $region8: #{tpu_custom_call.1} parent=1 // pred_region
      %30 = vsyncadd [#allocation6], 0
      %s31 = sshll.u32 %s1, 4
      %s32 = int_to_ptr.hbm [resolvable:$true] %s31
      %s33 = sshll.u32 [#allocation5], 4
      %s34 = int_to_ptr.vmem [resolvable:$true] %s33
      %39 = dma.hbm_to_vmem [thread:$0]  %s32, 256, %s34, [#allocation6], 128, 128, 8
    $region9: #{tpu_custom_call.1} parent=1 // pred_fallthru
      _
    // Predicated region
    $region10: #{tpu_custom_call.1} parent=1 // pred_check
      _
    $region11: #{tpu_custom_call.1} parent=1 // pred_check_branch
      %41 = sbr.rel (0) target = $region13
    $region12: #{tpu_custom_call.1} parent=1 // pred_region
      %43 = vsyncadd [#allocation6], 0
      %s44 = sshll.u32 %s2, 4
      %s45 = int_to_ptr.hbm [resolvable:$true] %s44
      %s46 = sshll.u32 [#allocation7], 4
      %s47 = int_to_ptr.vmem [resolvable:$true] %s46
      %52 = dma.hbm_to_vmem [thread:$0]  %s45, 512, %s47, [#allocation6], 128, 128, 8
    $region13: #{tpu_custom_call.1} parent=1 // pred_fallthru
      _
    // Predicated region
    $region14: #{tpu_custom_call.1} parent=1 // pred_check
      _
    $region15: #{tpu_custom_call.1} parent=1 // pred_check_branch
      %54 = sbr.rel (0) target = $region17
    $region16: #{tpu_custom_call.1} parent=1 // pred_region
      _
    $region17: #{tpu_custom_call.1} parent=1 // pred_fallthru
      _
    // Predicated region
    $region18: #{tpu_custom_call.1} parent=1 // pred_check
      _
    $region19: #{tpu_custom_call.1} parent=1 // pred_check_branch
      %56 = sbr.rel (0) target = $region21
    $region20: #{tpu_custom_call.1} parent=1 // pred_region
      _
    $region21: #{tpu_custom_call.1} parent=1 // pred_fallthru
      _
    // Predicated region
    $region22: #{tpu_custom_call.1} parent=1 // pred_check
      _
    $region23: #{tpu_custom_call.1} parent=1 // pred_check_branch
      %58 = sbr.rel (0) target = $region25
    $region24: #{tpu_custom_call.1} parent=1 // pred_region
      _
    $region25: #{tpu_custom_call.1} parent=1 // pred_fallthru
      _
    // Predicated region
    $region26: #{tpu_custom_call.1} parent=1 // pred_check
      _
    $region27: #{tpu_custom_call.1} parent=1 // pred_check_branch
      %60 = sbr.rel (0) target = $region29
    $region28: #{tpu_custom_call.1} parent=1 // pred_region
      %62 = dma.done [#allocation3], 256
    $region29: #{tpu_custom_call.1} parent=1 // pred_fallthru
      _
    // Predicated region
    $region30: #{tpu_custom_call.1} parent=1 // pred_check
      _
    $region31: #{tpu_custom_call.1} parent=1 // pred_check_branch
      %64 = sbr.rel (0) target = $region33
    $region32: #{tpu_custom_call.1} parent=1 // pred_region
      %66 = dma.done [#allocation6], 256
    $region33: #{tpu_custom_call.1} parent=1 // pred_fallthru
      _
    // Predicated region
    $region34: #{tpu_custom_call.1} parent=1 // pred_check
      _
    $region35: #{tpu_custom_call.1} parent=1 // pred_check_branch
      %68 = sbr.rel (0) target = $region37
    $region36: #{tpu_custom_call.1} parent=1 // pred_region
      %70 = dma.done [#allocation6], 512
    $region37: #{tpu_custom_call.1} parent=1 // pred_fallthru
      _
    %v71 = vld [vmem:[#allocation2] sm:$0xff]
    %v72 = vld [vmem:[#allocation2 + $0x8] sm:$0xff]
    %v73 = vld [vmem:[#allocation7] sm:$0xff]
    %v74 = vld [vmem:[#allocation7 + $0x8] sm:$0xff]
    %v75 = vld [vmem:[#allocation7 + $0x10] sm:$0xff]
    %v76 = vld [vmem:[#allocation7 + $0x18] sm:$0xff]
    %v77 = vld [vmem:[%s3] sm:$0x1]
    %v79 = vperm.slane %v77, 0
    %vm81 = vcmask 261120
    %v83 = vsel %vm81, %v71, 0
    %v86 = vsel %vm81, %v72, 0
    %88 = vmatpush.msra.mxu0 0.0
    %89 = vmatpush.msra.mxu0 0.0
    %90 = vmatpush.msra.mxu0 0.0
    %91 = vmatpush.msra.mxu0 0.0
    %92 = vmatpush.msra.mxu0 0.0
    %93 = vmatpush.msra.mxu0 0.0
    %94 = vmatpush.msra.mxu0 0.0
    %95 = vmatpush.msra.mxu0 0.0
    %96 = vmatpush.msra.mxu0 0.0
    %97 = vmatpush.msra.mxu0 0.0
    %98 = vmatpush.msra.mxu0 0.0
    %99 = vmatpush.msra.mxu0 0.0
    %v100 = vand.u32 %v76, 4294901760
    %101 = vmatpush.msra.mxu0 %v100
    %v102 = vand.u32 %v75, 4294901760
    %103 = vmatpush.msra.mxu0 %v102
    %v104 = vand.u32 %v74, 4294901760
    %105 = vmatpush.msra.mxu0 %v104
    %v106 = vand.u32 %v73, 4294901760
    %107 = vmatpush.msra.mxu0 %v106
    %v108 = vand.u32 %v83, 4294901760
    %v109 = vsub.f32 %v83, %v108
    %v110 = vand.u32 %v109, 4294901760
    %v111 = vsub.f32 %v109, %v110
    %v112 = vand.u32 %v111, 4294901760
    %113 = vmatmul.f32.gmra.mxu0 %v112
    %v114 = vpop.f32.mrf.mxu0
    %v115 = vadd.f32 %v79, %v114
    %v116 = vand.u32 %v86, 4294901760
    %v117 = vsub.f32 %v86, %v116
    %v118 = vand.u32 %v117, 4294901760
    %v119 = vsub.f32 %v117, %v118
    %v120 = vand.u32 %v119, 4294901760
    %121 = vmatmul.f32.gmra.mxu0 %v120
    %v122 = vpop.f32.mrf.mxu0
    %v123 = vadd.f32 %v79, %v122
    %124 = vdwg.mxu0
    %125 = vmatpush.msra.mxu0 0.0
    %126 = vmatpush.msra.mxu0 0.0
    %127 = vmatpush.msra.mxu0 0.0
    %128 = vmatpush.msra.mxu0 0.0
    %129 = vmatpush.msra.mxu0 0.0
    %130 = vmatpush.msra.mxu0 0.0
    %131 = vmatpush.msra.mxu0 0.0
    %132 = vmatpush.msra.mxu0 0.0
    %133 = vmatpush.msra.mxu0 0.0
    %134 = vmatpush.msra.mxu0 0.0
    %135 = vmatpush.msra.mxu0 0.0
    %136 = vmatpush.msra.mxu0 0.0
    %v137 = vand.u32 %v76, 4294901760
    %v138 = vsub.f32 %v76, %v137
    %v139 = vand.u32 %v138, 4294901760
    %v140 = vsub.f32 %v138, %v139
    %v141 = vand.u32 %v140, 4294901760
    %142 = vmatpush.msra.mxu0 %v141
    %v143 = vand.u32 %v75, 4294901760
    %v144 = vsub.f32 %v75, %v143
    %v145 = vand.u32 %v144, 4294901760
    %v146 = vsub.f32 %v144, %v145
    %v147 = vand.u32 %v146, 4294901760
    %148 = vmatpush.msra.mxu0 %v147
    %v149 = vand.u32 %v74, 4294901760
    %v150 = vsub.f32 %v74, %v149
    %v151 = vand.u32 %v150, 4294901760
    %v152 = vsub.f32 %v150, %v151
    %v153 = vand.u32 %v152, 4294901760
    %154 = vmatpush.msra.mxu0 %v153
    %v155 = vand.u32 %v73, 4294901760
    %v156 = vsub.f32 %v73, %v155
    %v157 = vand.u32 %v156, 4294901760
    %v158 = vsub.f32 %v156, %v157
    %v159 = vand.u32 %v158, 4294901760
    %160 = vmatpush.msra.mxu0 %v159
    %v161 = vand.u32 %v83, 4294901760
    %162 = vmatmul.f32.gmra.mxu0 %v161
    %v163 = vpop.f32.mrf.mxu0
    %v164 = vadd.f32 %v115, %v163
    %v165 = vand.u32 %v86, 4294901760
    %166 = vmatmul.f32.gmra.mxu0 %v165
    %v167 = vpop.f32.mrf.mxu0
    %v168 = vadd.f32 %v123, %v167
    %169 = vdwg.mxu0
    %170 = vmatpush.msra.mxu0 0.0
    %171 = vmatpush.msra.mxu0 0.0
    %172 = vmatpush.msra.mxu0 0.0
    %173 = vmatpush.msra.mxu0 0.0
    %174 = vmatpush.msra.mxu0 0.0
    %175 = vmatpush.msra.mxu0 0.0
    %176 = vmatpush.msra.mxu0 0.0
    %177 = vmatpush.msra.mxu0 0.0
    %178 = vmatpush.msra.mxu0 0.0
    %179 = vmatpush.msra.mxu0 0.0
    %180 = vmatpush.msra.mxu0 0.0
    %181 = vmatpush.msra.mxu0 0.0
    %v182 = vand.u32 %v76, 4294901760
    %v183 = vsub.f32 %v76, %v182
    %184 = vmatpush.msra.mxu0 %v183
    %v185 = vand.u32 %v75, 4294901760
    %v186 = vsub.f32 %v75, %v185
    %187 = vmatpush.msra.mxu0 %v186
    %v188 = vand.u32 %v74, 4294901760
    %v189 = vsub.f32 %v74, %v188
    %190 = vmatpush.msra.mxu0 %v189
    %v191 = vand.u32 %v73, 4294901760
    %v192 = vsub.f32 %v73, %v191
    %193 = vmatpush.msra.mxu0 %v192
    %v194 = vand.u32 %v83, 4294901760
    %v195 = vsub.f32 %v83, %v194
    %196 = vmatmul.f32.gmra.mxu0 %v195
    %v197 = vpop.f32.mrf.mxu0
    %v198 = vadd.f32 %v164, %v197
    %v199 = vand.u32 %v86, 4294901760
    %v200 = vsub.f32 %v86, %v199
    %201 = vmatmul.f32.gmra.mxu0 %v200
    %v202 = vpop.f32.mrf.mxu0
    %v203 = vadd.f32 %v168, %v202
    %204 = vdwg.mxu0
    %205 = vmatpush.msra.mxu0 0.0
    %206 = vmatpush.msra.mxu0 0.0
    %207 = vmatpush.msra.mxu0 0.0
    %208 = vmatpush.msra.mxu0 0.0
    %209 = vmatpush.msra.mxu0 0.0
    %210 = vmatpush.msra.mxu0 0.0
    %211 = vmatpush.msra.mxu0 0.0
    %212 = vmatpush.msra.mxu0 0.0
    %213 = vmatpush.msra.mxu0 0.0
    %214 = vmatpush.msra.mxu0 0.0
    %215 = vmatpush.msra.mxu0 0.0
    %216 = vmatpush.msra.mxu0 0.0
    %v217 = vand.u32 %v76, 4294901760
    %218 = vmatpush.msra.mxu0 %v217
    %v219 = vand.u32 %v75, 4294901760
    %220 = vmatpush.msra.mxu0 %v219
    %v221 = vand.u32 %v74, 4294901760
    %222 = vmatpush.msra.mxu0 %v221
    %v223 = vand.u32 %v73, 4294901760
    %224 = vmatpush.msra.mxu0 %v223
    %v225 = vand.u32 %v83, 4294901760
    %v226 = vsub.f32 %v83, %v225
    %v227 = vand.u32 %v226, 4294901760
    %228 = vmatmul.f32.gmra.mxu0 %v227
    %v229 = vpop.f32.mrf.mxu0
    %v230 = vadd.f32 %v198, %v229
    %v231 = vand.u32 %v86, 4294901760
    %v232 = vsub.f32 %v86, %v231
    %v233 = vand.u32 %v232, 4294901760
    %234 = vmatmul.f32.gmra.mxu0 %v233
    %v235 = vpop.f32.mrf.mxu0
    %v236 = vadd.f32 %v203, %v235
    %237 = vdwg.mxu0
    %238 = vmatpush.msra.mxu0 0.0
    %239 = vmatpush.msra.mxu0 0.0
    %240 = vmatpush.msra.mxu0 0.0
    %241 = vmatpush.msra.mxu0 0.0
    %242 = vmatpush.msra.mxu0 0.0
    %243 = vmatpush.msra.mxu0 0.0
    %244 = vmatpush.msra.mxu0 0.0
    %245 = vmatpush.msra.mxu0 0.0
    %246 = vmatpush.msra.mxu0 0.0
    %247 = vmatpush.msra.mxu0 0.0
    %248 = vmatpush.msra.mxu0 0.0
    %249 = vmatpush.msra.mxu0 0.0
    %v250 = vand.u32 %v76, 4294901760
    %v251 = vsub.f32 %v76, %v250
    %v252 = vand.u32 %v251, 4294901760
    %253 = vmatpush.msra.mxu0 %v252
    %v254 = vand.u32 %v75, 4294901760
    %v255 = vsub.f32 %v75, %v254
    %v256 = vand.u32 %v255, 4294901760
    %257 = vmatpush.msra.mxu0 %v256
    %v258 = vand.u32 %v74, 4294901760
    %v259 = vsub.f32 %v74, %v258
    %v260 = vand.u32 %v259, 4294901760
    %261 = vmatpush.msra.mxu0 %v260
    %v262 = vand.u32 %v73, 4294901760
    %v263 = vsub.f32 %v73, %v262
    %v264 = vand.u32 %v263, 4294901760
    %265 = vmatpush.msra.mxu0 %v264
    %v266 = vand.u32 %v83, 4294901760
    %267 = vmatmul.f32.gmra.mxu0 %v266
    %v268 = vpop.f32.mrf.mxu0
    %v269 = vadd.f32 %v230, %v268
    %v270 = vand.u32 %v86, 4294901760
    %271 = vmatmul.f32.gmra.mxu0 %v270
    %v272 = vpop.f32.mrf.mxu0
    %v273 = vadd.f32 %v236, %v272
    %274 = vdwg.mxu0
    %275 = vmatpush.msra.mxu0 0.0
    %276 = vmatpush.msra.mxu0 0.0
    %277 = vmatpush.msra.mxu0 0.0
    %278 = vmatpush.msra.mxu0 0.0
    %279 = vmatpush.msra.mxu0 0.0
    %280 = vmatpush.msra.mxu0 0.0
    %281 = vmatpush.msra.mxu0 0.0
    %282 = vmatpush.msra.mxu0 0.0
    %283 = vmatpush.msra.mxu0 0.0
    %284 = vmatpush.msra.mxu0 0.0
    %285 = vmatpush.msra.mxu0 0.0
    %286 = vmatpush.msra.mxu0 0.0
    %v287 = vand.u32 %v76, 4294901760
    %288 = vmatpush.msra.mxu0 %v287
    %v289 = vand.u32 %v75, 4294901760
    %290 = vmatpush.msra.mxu0 %v289
    %v291 = vand.u32 %v74, 4294901760
    %292 = vmatpush.msra.mxu0 %v291
    %v293 = vand.u32 %v73, 4294901760
    %294 = vmatpush.msra.mxu0 %v293
    %v295 = vand.u32 %v83, 4294901760
    %296 = vmatmul.f32.gmra.mxu0 %v295
    %v297 = vpop.f32.mrf.mxu0
    %v298 = vadd.f32 %v269, %v297
    %v299 = vand.u32 %v86, 4294901760
    %300 = vmatmul.f32.gmra.mxu0 %v299
    %v301 = vpop.f32.mrf.mxu0
    %v302 = vadd.f32 %v273, %v301
    %303 = vdwg.mxu0
    %v304 = vld [vmem:[#allocation5] sm:$0xff]
    %v305 = vld [vmem:[#allocation5 + $0x8] sm:$0xff]
    %v306 = vadd.f32 %v298, %v304
    %v307 = vadd.f32 %v302, %v305
    %v308 = vsel %vm81, %v306, 0.0
    %309 = vadd.xlane.f32.xlu0 %v308
    %v310 = vpop.xlane.xlu0 %309
    %v311 = vsel %vm81, %v307, 0.0
    %312 = vadd.xlane.f32.xlu0 %v311
    %v313 = vpop.xlane.xlu0 %312
    %v314 = vmul.f32 %v310, 0.03125
    %v315 = vmul.f32 %v313, 0.03125
    %v316 = vmul.f32 %v306, %v306
    %v317 = vmul.f32 %v307, %v307
    %v318 = vsel %vm81, %v316, 0.0
    %319 = vadd.xlane.f32.xlu0 %v318
    %v320 = vpop.xlane.xlu0 %319
    %v321 = vsel %vm81, %v317, 0.0
    %322 = vadd.xlane.f32.xlu0 %v321
    %v323 = vpop.xlane.xlu0 %322
    %v324 = vmul.f32 %v320, 0.03125
    %v325 = vmul.f32 %v323, 0.03125
    %v326 = vmul.f32 %v314, %v314
    %v327 = vmul.f32 %v315, %v315
    %v328 = vsub.f32 %v324, %v326
    %v329 = vsub.f32 %v325, %v327
    %v330 = vmax.f32 %v328, 0.0
    %v331 = vmax.f32 %v329, 0.0
    %v332 = vadd.f32 %v330, 1e-12
    %v333 = vadd.f32 %v331, 1e-12
    %v334 = vrsqrt.pop %v332
    %v335 = vmul.f32 %v334, %v332
    %v336 = vmul.f32 %v335, %v334
    %v337 = vmul.f32 0.5, %v336
    %v338 = vsub.f32 1.5, %v337
    %v339 = vmul.f32 %v334, %v338
    %vm340 = vweird.f32 %v332
    %vm341 = vweird.f32 %v334
    %vm342 = vmor %vm340, %vm341
    %v343 = vsel %vm342, %v334, %v339
    %v344 = vrsqrt.pop %v333
    %v345 = vmul.f32 %v344, %v333
    %v346 = vmul.f32 %v345, %v344
    %v347 = vmul.f32 0.5, %v346
    %v348 = vsub.f32 1.5, %v347
    %v349 = vmul.f32 %v344, %v348
    %vm350 = vweird.f32 %v333
    %vm351 = vweird.f32 %v344
    %vm352 = vmor %vm350, %vm351
    %v353 = vsel %vm352, %v344, %v349
    %v354 = vsub.f32 %v306, %v314
    %v355 = vsub.f32 %v307, %v315
    %v356 = vmul.f32 %v354, %v343
    %v357 = vmul.f32 %v355, %v353
    %v358 = vld [vmem:[%s4] sm:$0x1]
    %v360 = vperm.slane %v358, 0
    %v362 = vmul.f32 %v356, %v360
    %v363 = vmul.f32 %v357, %v360
    %v364 = vld [vmem:[%s5] sm:$0x1]
    %v366 = vperm.slane %v364, 0
    %v368 = vadd.f32 %v362, %v366
    %v369 = vadd.f32 %v363, %v366
    %370 = vst.msk [vmem:[#allocation8] sm:$0xff] %vm81, %v368
    %371 = vst.msk [vmem:[#allocation8 + $0x8] sm:$0xff] %vm81, %v369
    // Predicated region
    $region38: #{tpu_custom_call.1} parent=1 // pred_check
      _
    $region39: #{tpu_custom_call.1} parent=1 // pred_check_branch
      %373 = sbr.rel (0) target = $region41
    $region40: #{tpu_custom_call.1} parent=1 // pred_region
      %375 = vsyncadd [#allocation4], 0
      %s376 = sshll.u32 [#allocation8], 4
      %s377 = int_to_ptr.vmem [resolvable:$true] %s376
      %s378 = sshll.u32 %s6, 4
      %s379 = int_to_ptr.hbm [resolvable:$true] %s378
      %384 = dma.vmem_to_hbm [thread:$0]  %s377, 256, %s379, [#allocation4], 128, 128, 8
    $region41: #{tpu_custom_call.1} parent=1 // pred_fallthru
      _
    // Predicated region
    $region42: #{tpu_custom_call.1} parent=1 // pred_check
      _
    $region43: #{tpu_custom_call.1} parent=1 // pred_check_branch
      %386 = sbr.rel (0) target = $region45
    $region44: #{tpu_custom_call.1} parent=1 // pred_region
      %388 = dma.done [#allocation4], 256
    $region45: #{tpu_custom_call.1} parent=1 // pred_fallthru
      _
    %389 = vsyncpa [#allocation3], 1
    %390 = vsyncpa [#allocation6], 1
    %391 = vsyncpa [#allocation4], 1

</llo_original>
